<compile_context>
chip_gen: v7x
topology: tpu7x:2x2x1
jax: 0.10.0
libtpu: 0.0.40
codegen_flags: <defaults>
</compile_context>

<pallas_src>
import jax
import jax.numpy as jnp
from jax.experimental import pallas as pl
from jax.experimental.pallas import tpu as pltpu

LEAKY_SLOPE = 0.01   # nn.LeakyReLU() default
BN_EPS = 1e-5        # nn.BatchNorm1d default


# ---------------------------------------------------------------------------
# Kernel: one grid step == TILE_T independent tasks.  Refs:
#   x_ref    (TT, B*F, 2E)  task activations (f32 or bf16)
#   w12_ref  (3E, E)        [w1 (2E,E) ; w2 (E,E)] stacked on rows (x's dtype)
#   vecs_ref (3, E)         rows: b1, b2, w3 (f32)
#   bn_ref   (6, F, 1)      rows: g1, be1, g2, be2, g3, be3 (f32)
#   o_ref    (B, TT)        per-step output, lane-dense (TT on the lane axis)
# ---------------------------------------------------------------------------
def mlp_kernel(x_ref, w12_ref, vecs_ref, bn_ref, o_ref):
    TT, BF, D2 = x_ref.shape
    E = w12_ref.shape[1]
    F = bn_ref.shape[1]
    B = BF // F

    def bn_act(h, idx, leaky):
        # BatchNorm1d(num_features=F), training-mode stats: per few-channel,
        # reduce over (per-task batch, last dim), biased variance.  Two-pass
        # variance avoids E[x^2]-mean^2 cancellation; gamma is folded into the
        # rsqrt scale.  h: (TT, B, F, C), stats per (task, F).
        C = h.shape[-1]
        gamma = bn_ref[2 * idx]          # (F, 1) -> broadcasts over (TT,B,F,C)
        beta = bn_ref[2 * idx + 1]       # (F, 1)
        inv_n = 1.0 / float(B * C)
        mean = jnp.sum(h, axis=(1, 3), keepdims=True) * inv_n
        hc = h - mean
        var = jnp.sum(hc * hc, axis=(1, 3), keepdims=True) * inv_n
        h = hc * (gamma * jax.lax.rsqrt(var + BN_EPS)) + beta
        if leaky:
            h = jnp.where(h >= 0, h, LEAKY_SLOPE * h)
        return h

    # Reshapes keep E on the lane axis -> layout no-ops.
    x = x_ref[...].reshape(TT * BF, D2)
    w1 = w12_ref[:D2, :]                 # (2E, E) static view
    w2 = w12_ref[D2:, :]                 # (E, E)  static view

    # rel_fc1: Linear(2E -> E) + BN + LeakyReLU (+ Dropout = identity)
    h = jnp.dot(x, w1, preferred_element_type=jnp.float32) + vecs_ref[0]
    h = bn_act(h.reshape(TT, B, F, E), 0, leaky=True)

    # rel_fc2: Linear(E -> E) + BN + LeakyReLU (+ Dropout = identity)
    h = jnp.dot(h.reshape(TT * BF, E).astype(w2.dtype), w2,
                preferred_element_type=jnp.float32) + vecs_ref[1]
    h = bn_act(h.reshape(TT, B, F, E), 1, leaky=True)

    # rel_fc3: Linear(E -> 1) as a lane reduction (an N=1 MXU matmul would
    # waste the systolic array).  The +b3 bias is omitted: it is exactly
    # cancelled by the following BatchNorm's mean subtraction (dead code).
    y = jnp.sum(h * vecs_ref[2], axis=-1, keepdims=True)       # (TT, B, F, 1)
    y = bn_act(y, 2, leaky=False)

    # torch.mean(x, 1) over the few dim, stored transposed so the output
    # block's last (lane) dim is TILE_T -> unmasked lane-dense stores.
    o_ref[...] = jnp.mean(y[..., 0], axis=2).T                  # (B, TT)


# ---------------------------------------------------------------------------
# Wrapper
# ---------------------------------------------------------------------------
def pack_params(params, *, matmul_dtype=jnp.float32):
    """Pack parameters into 3 arrays (3 DMA descriptors).

    Call ONCE per parameter update (not per forward) - at these sizes the
    wrapper-side concatenate/stack cost rivals the kernel itself.  Use
    matmul_dtype=jnp.bfloat16 on v6e/v7x: halves the x/weight DMA bytes and
    roughly doubles MXU issue rate; accumulation stays f32 in the kernel.
    """
    w12 = jnp.concatenate([params['w1'], params['w2']], axis=0)        # (3E, E)
    vecs = jnp.stack([params['b1'], params['b2'], params['w3']],
                     axis=0)                                           # (3, E)
    # b3 intentionally NOT packed: cancelled by rel_fc3's BatchNorm.
    bn = jnp.stack([params['g1'], params['be1'],
                    params['g2'], params['be2'],
                    params['g3'], params['be3']], axis=0)[..., None]   # (6,F,1)
    return (w12.astype(matmul_dtype),
            vecs.astype(jnp.float32),
            bn.astype(jnp.float32))


def mlp_forward(support_emb, packed, *, tile_t=None):
    """support_emb: (B, F, 2, E) like the PyTorch module (returns (B, 1)), or
    (T, B, F, 2, E) to batch T independent tasks into one pallas_call
    (returns (T, B, 1); per-task BatchNorm statistics are preserved)."""
    w12, vecs, bn = packed
    single = support_emb.ndim == 4
    if single:
        support_emb = support_emb[None]
    T, B, F, P, E = support_emb.shape
    x = support_emb.reshape(T, B * F, P * E).astype(w12.dtype)

    # TILE_T tasks per grid step: big-M matmuls, amortized per-step overhead.
    # 128 f32 tasks ≈ 1 MiB x-slab + ~3 MiB intermediates -> fits v5e's 16 MiB
    # default scoped VMEM; with T >= 2*tile_t there are >= 2 "parallel" steps
    # so both v7x TensorCores get work.
    if tile_t is None:
        tile_t = T if T <= 128 else 128
    num_steps = pl.cdiv(T, tile_t)
    if num_steps > 1 and tile_t % 128 != 0:
        raise ValueError("tile_t must be a multiple of 128 (lane-dense output "
                         "blocks) unless all tasks fit in one step")
    t_pad = num_steps * tile_t
    if t_pad != T:
        # Padded tasks are fully independent (per-task BN) and sliced off below.
        x = jnp.pad(x, ((0, t_pad - T), (0, 0), (0, 0)))

    out = pl.pallas_call(
        mlp_kernel,
        out_shape=jax.ShapeDtypeStruct((B, t_pad), jnp.float32),
        grid=(num_steps,),
        in_specs=[
            pl.BlockSpec((tile_t, B * F, P * E), lambda t: (t, 0, 0)),  # x slab
            pl.BlockSpec(w12.shape, lambda t: (0, 0)),       # resident weights
            pl.BlockSpec(vecs.shape, lambda t: (0, 0)),      # resident vectors
            pl.BlockSpec(bn.shape, lambda t: (0, 0, 0)),     # resident BN params
        ],
        out_specs=pl.BlockSpec((B, tile_t), lambda t: (0, t)),
        compiler_params=pltpu.CompilerParams(
            dimension_semantics=("parallel",)),               # megacore on v7x
    )(x, w12, vecs, bn)

    out = out.T[:T]                                           # (T, B)
    if single:
        return out[0].reshape(B, 1)
    return out[..., None]                                     # (T, B, 1)


# ---------------------------------------------------------------------------
# Parameter init (mirrors the PyTorch module's init) and pure-JAX reference
# ---------------------------------------------------------------------------
def init_params(key, embed_dim, few):
    E = embed_dim
    k1, k2, k3, kb1, kb2, kb3 = jax.random.split(key, 6)

    def xavier_normal(k, fan_in, fan_out, shape):
        std = (2.0 / (fan_in + fan_out)) ** 0.5
        return (std * jax.random.normal(k, shape)).astype(jnp.float32)

    def linear_bias(k, fan_in, shape):
        bound = 1.0 / (fan_in ** 0.5)
        return jax.random.uniform(k, shape, minval=-bound, maxval=bound,
                                  dtype=jnp.float32)

    return {
        # Linear weights stored as (in_features, out_features).
        'w1': xavier_normal(k1, 2 * E, E, (2 * E, E)),
        'b1': linear_bias(kb1, 2 * E, (E,)),
        'w2': xavier_normal(k2, E, E, (E, E)),
        'b2': linear_bias(kb2, E, (E,)),
        'w3': xavier_normal(k3, E, 1, (E,)),
        'b3': linear_bias(kb3, E, ()),
        # BatchNorm1d(few) affine params, default init.
        'g1': jnp.ones((few,), jnp.float32), 'be1': jnp.zeros((few,), jnp.float32),
        'g2': jnp.ones((few,), jnp.float32), 'be2': jnp.zeros((few,), jnp.float32),
        'g3': jnp.ones((few,), jnp.float32), 'be3': jnp.zeros((few,), jnp.float32),
    }


def ref_forward(support_emb, params, matmul_dtype=jnp.float32):
    """Pure-JAX reference with identical semantics (training-mode batch-stat
    BN, biased variance, dropout = identity).  matmul_dtype mirrors the
    kernel's optional bf16 matmul-input cast (accumulation stays f32)."""
    B, F, P, E = support_emb.shape
    x = support_emb.reshape(B, F, P * E).astype(jnp.float32)

    def bn(h, g, be):
        mean = jnp.mean(h, axis=(0, 2), keepdims=True)
        var = jnp.mean((h - mean) ** 2, axis=(0, 2), keepdims=True)
        return ((h - mean) / jnp.sqrt(var + BN_EPS) * g[None, :, None]
                + be[None, :, None])

    leaky = lambda h: jnp.where(h >= 0, h, LEAKY_SLOPE * h)
    mm = lambda a, b: jnp.einsum('bfi,io->bfo', a.astype(matmul_dtype),
                                 b.astype(matmul_dtype),
                                 preferred_element_type=jnp.float32)

    h = leaky(bn(mm(x, params['w1']) + params['b1'], params['g1'], params['be1']))
    h = leaky(bn(mm(h, params['w2']) + params['b2'], params['g2'], params['be2']))
    y = bn(jnp.sum(h * params['w3'], axis=-1, keepdims=True) + params['b3'],
           params['g3'], params['be3'])
    return jnp.mean(y, axis=1)


if __name__ == "__main__":
    # parameter = {'embed_dim': 32, 'few': 8, 'dropout': 0.2}
    B, FEW, EMBED = 4, 8, 32

    key = jax.random.PRNGKey(0)
    k_emb, k_params, k_tasks = jax.random.split(key, 3)
    params = init_params(k_params, EMBED, FEW)

    # Pack parameters ONCE, outside the per-forward hot path.
    packed_f32 = pack_params(params)

    # --- single-task path (matches the PyTorch module's forward) -----------
    support_emb = jax.random.normal(k_emb, (B, FEW, 2, EMBED), dtype=jnp.float32)
    support_set = None  # unused by forward (shape-only module input)
    r_meta = jax.block_until_ready(mlp_forward(support_emb, packed_f32))
    expected = jax.block_until_ready(ref_forward(support_emb, params))
    assert r_meta.shape == (B, 1)
    assert jnp.allclose(r_meta, expected, rtol=1e-4, atol=1e-4)

    # --- task-batched path: 256 tasks, 128 per step -> 2 "parallel" steps --
    T = 256
    emb_T = jax.random.normal(k_tasks, (T, B, FEW, 2, EMBED), dtype=jnp.float32)
    r_T = jax.block_until_ready(mlp_forward(emb_T, packed_f32))
    exp_T = jax.block_until_ready(
        jax.vmap(lambda e: ref_forward(e, params))(emb_T))
    assert r_T.shape == (T, B, 1)
    assert jnp.allclose(r_T, exp_T, rtol=1e-4, atol=1e-4)

    # --- bf16 matmul-input fast path (v6e/v7x), f32 accumulation ------------
    packed_bf16 = pack_params(params, matmul_dtype=jnp.bfloat16)
    r_bf16 = jax.block_until_ready(mlp_forward(emb_T, packed_bf16))
    exp_bf16 = jax.block_until_ready(
        jax.vmap(lambda e: ref_forward(e, params, jnp.bfloat16))(emb_T))
    assert r_bf16.shape == (T, B, 1)
    assert jnp.allclose(r_bf16, exp_bf16, rtol=1e-3, atol=1e-3)

    print("KERNEL_OK")
</pallas_src>

<mosaic_0001>
module attributes {stable_mosaic.version = 11 : i64} {
  func.func @mlp_kernel(%arg0: i32, %arg1: memref<1x32x64xf32, #tpu.memory_space<vmem>>, %arg2: memref<96x32xf32, #tpu.memory_space<vmem>>, %arg3: memref<3x32xf32, #tpu.memory_space<vmem>>, %arg4: memref<6x8x1xf32, #tpu.memory_space<vmem>>, %arg5: memref<4x1xf32, #tpu.memory_space<vmem>>) attributes {dimension_semantics = [#tpu.dimension_semantics<parallel>], iteration_bounds = array<i64: 1>, scalar_prefetch = 0 : i64, scratch_operands = 0 : i64, tpu.core_type = #tpu.core_type<tc>, window_params = [{transform_indices = @transform_0, window_bounds = array<i64: 1, 32, 64>}, {pipeline_mode = #tpu.pipeline_mode<synchronous>, transform_indices = @transform_1, window_bounds = array<i64: 96, 32>}, {pipeline_mode = #tpu.pipeline_mode<synchronous>, transform_indices = @transform_2, window_bounds = array<i64: 3, 32>}, {pipeline_mode = #tpu.pipeline_mode<synchronous>, transform_indices = @transform_3, window_bounds = array<i64: 6, 8, 1>}, {transform_indices = @transform_4, window_bounds = array<i64: 4, 1>}]} {
    %c0 = arith.constant 0 : index
    %c0_0 = arith.constant 0 : index
    %c0_1 = arith.constant 0 : index
    %0 = vector.load %arg1[%c0, %c0_0, %c0_1] : memref<1x32x64xf32, #tpu.memory_space<vmem>>, vector<1x32x64xf32>
    %1 = vector.shape_cast %0 : vector<1x32x64xf32> to vector<32x64xf32>
    %c0_2 = arith.constant 0 : index
    %c0_3 = arith.constant 0 : index
    %2 = vector.load %arg2[%c0_2, %c0_3] : memref<96x32xf32, #tpu.memory_space<vmem>>, vector<64x32xf32>
    %c64 = arith.constant 64 : index
    %c0_4 = arith.constant 0 : index
    %3 = vector.load %arg2[%c64, %c0_4] : memref<96x32xf32, #tpu.memory_space<vmem>>, vector<32x32xf32>
    %cst = arith.constant dense<0.000000e+00> : vector<32x32xf32>
    %4 = tpu.matmul %1, %2, %cst {dimension_numbers = #tpu.dot_dimension_numbers<[1], [0], [0], [1], [0, 0, 1, 1], [], []>} : vector<32x64xf32>, vector<64x32xf32>, vector<32x32xf32> -> vector<32x32xf32>
    %c0_5 = arith.constant 0 : index
    %c0_6 = arith.constant 0 : index
    %5 = vector.load %arg3[%c0_5, %c0_6] : memref<3x32xf32, #tpu.memory_space<vmem>>, vector<1x32xf32>
    %6 = vector.shape_cast %5 : vector<1x32xf32> to vector<32xf32>
    %7 = vector.shape_cast %6 : vector<32xf32> to vector<1x32xf32>
    %8 = vector.broadcast %7 : vector<1x32xf32> to vector<32x32xf32>
    %9 = arith.addf %4, %8 : vector<32x32xf32>
    %10 = vector.shape_cast %9 : vector<32x32xf32> to vector<1x4x8x32xf32>
    %c0_7 = arith.constant 0 : index
    %c0_8 = arith.constant 0 : index
    %c0_9 = arith.constant 0 : index
    %11 = vector.load %arg4[%c0_7, %c0_8, %c0_9] : memref<6x8x1xf32, #tpu.memory_space<vmem>>, vector<1x8x1xf32>
    %12 = vector.shape_cast %11 : vector<1x8x1xf32> to vector<8x1xf32>
    %c1 = arith.constant 1 : index
    %c0_10 = arith.constant 0 : index
    %c0_11 = arith.constant 0 : index
    %13 = vector.load %arg4[%c1, %c0_10, %c0_11] : memref<6x8x1xf32, #tpu.memory_space<vmem>>, vector<1x8x1xf32>
    %14 = vector.shape_cast %13 : vector<1x8x1xf32> to vector<8x1xf32>
    %cst_12 = arith.constant dense<0.000000e+00> : vector<1x8xf32>
    %15 = vector.multi_reduction <add>, %10, %cst_12 [1, 3] : vector<1x4x8x32xf32> to vector<1x8xf32>
    %16 = vector.shape_cast %15 : vector<1x8xf32> to vector<1x1x8x1xf32>
    %cst_13 = arith.constant 7.812500e-03 : f32
    %17 = vector.broadcast %cst_13 : f32 to vector<1x1x8x1xf32>
    %18 = arith.mulf %16, %17 : vector<1x1x8x1xf32>
    %19 = vector.broadcast %18 : vector<1x1x8x1xf32> to vector<1x4x8x32xf32>
    %20 = arith.subf %10, %19 : vector<1x4x8x32xf32>
    %21 = arith.mulf %20, %20 : vector<1x4x8x32xf32>
    %cst_14 = arith.constant dense<0.000000e+00> : vector<1x8xf32>
    %22 = vector.multi_reduction <add>, %21, %cst_14 [1, 3] : vector<1x4x8x32xf32> to vector<1x8xf32>
    %23 = vector.shape_cast %22 : vector<1x8xf32> to vector<1x1x8x1xf32>
    %cst_15 = arith.constant 7.812500e-03 : f32
    %24 = vector.broadcast %cst_15 : f32 to vector<1x1x8x1xf32>
    %25 = arith.mulf %23, %24 : vector<1x1x8x1xf32>
    %cst_16 = arith.constant 9.99999974E-6 : f32
    %26 = vector.broadcast %cst_16 : f32 to vector<1x1x8x1xf32>
    %27 = arith.addf %25, %26 : vector<1x1x8x1xf32>
    %28 = math.rsqrt %27 : vector<1x1x8x1xf32>
    %29 = vector.shape_cast %12 : vector<8x1xf32> to vector<1x1x8x1xf32>
    %30 = arith.mulf %29, %28 : vector<1x1x8x1xf32>
    %31 = vector.broadcast %30 : vector<1x1x8x1xf32> to vector<1x4x8x32xf32>
    %32 = arith.mulf %20, %31 : vector<1x4x8x32xf32>
    %33 = vector.shape_cast %14 : vector<8x1xf32> to vector<1x1x8x1xf32>
    %34 = vector.broadcast %33 : vector<1x1x8x1xf32> to vector<1x4x8x32xf32>
    %35 = arith.addf %32, %34 : vector<1x4x8x32xf32>
    %cst_17 = arith.constant 0.000000e+00 : f32
    %36 = vector.broadcast %cst_17 : f32 to vector<1x4x8x32xf32>
    %37 = arith.cmpf oge, %35, %36 : vector<1x4x8x32xf32>
    %cst_18 = arith.constant 0.00999999977 : f32
    %38 = vector.broadcast %cst_18 : f32 to vector<1x4x8x32xf32>
    %39 = arith.mulf %38, %35 : vector<1x4x8x32xf32>
    %40 = arith.select %37, %35, %39 : vector<1x4x8x32xi1>, vector<1x4x8x32xf32>
    %41 = vector.shape_cast %40 : vector<1x4x8x32xf32> to vector<32x32xf32>
    %cst_19 = arith.constant dense<0.000000e+00> : vector<32x32xf32>
    %42 = tpu.matmul %41, %3, %cst_19 {dimension_numbers = #tpu.dot_dimension_numbers<[1], [0], [0], [1], [0, 0, 1, 1], [], []>} : vector<32x32xf32>, vector<32x32xf32>, vector<32x32xf32> -> vector<32x32xf32>
    %c1_20 = arith.constant 1 : index
    %c0_21 = arith.constant 0 : index
    %43 = vector.load %arg3[%c1_20, %c0_21] : memref<3x32xf32, #tpu.memory_space<vmem>>, vector<1x32xf32>
    %44 = vector.shape_cast %43 : vector<1x32xf32> to vector<32xf32>
    %45 = vector.shape_cast %44 : vector<32xf32> to vector<1x32xf32>
    %46 = vector.broadcast %45 : vector<1x32xf32> to vector<32x32xf32>
    %47 = arith.addf %42, %46 : vector<32x32xf32>
    %48 = vector.shape_cast %47 : vector<32x32xf32> to vector<1x4x8x32xf32>
    %c2 = arith.constant 2 : index
    %c0_22 = arith.constant 0 : index
    %c0_23 = arith.constant 0 : index
    %49 = vector.load %arg4[%c2, %c0_22, %c0_23] : memref<6x8x1xf32, #tpu.memory_space<vmem>>, vector<1x8x1xf32>
    %50 = vector.shape_cast %49 : vector<1x8x1xf32> to vector<8x1xf32>
    %c3 = arith.constant 3 : index
    %c0_24 = arith.constant 0 : index
    %c0_25 = arith.constant 0 : index
    %51 = vector.load %arg4[%c3, %c0_24, %c0_25] : memref<6x8x1xf32, #tpu.memory_space<vmem>>, vector<1x8x1xf32>
    %52 = vector.shape_cast %51 : vector<1x8x1xf32> to vector<8x1xf32>
    %cst_26 = arith.constant dense<0.000000e+00> : vector<1x8xf32>
    %53 = vector.multi_reduction <add>, %48, %cst_26 [1, 3] : vector<1x4x8x32xf32> to vector<1x8xf32>
    %54 = vector.shape_cast %53 : vector<1x8xf32> to vector<1x1x8x1xf32>
    %cst_27 = arith.constant 7.812500e-03 : f32
    %55 = vector.broadcast %cst_27 : f32 to vector<1x1x8x1xf32>
    %56 = arith.mulf %54, %55 : vector<1x1x8x1xf32>
    %57 = vector.broadcast %56 : vector<1x1x8x1xf32> to vector<1x4x8x32xf32>
    %58 = arith.subf %48, %57 : vector<1x4x8x32xf32>
    %59 = arith.mulf %58, %58 : vector<1x4x8x32xf32>
    %cst_28 = arith.constant dense<0.000000e+00> : vector<1x8xf32>
    %60 = vector.multi_reduction <add>, %59, %cst_28 [1, 3] : vector<1x4x8x32xf32> to vector<1x8xf32>
    %61 = vector.shape_cast %60 : vector<1x8xf32> to vector<1x1x8x1xf32>
    %cst_29 = arith.constant 7.812500e-03 : f32
    %62 = vector.broadcast %cst_29 : f32 to vector<1x1x8x1xf32>
    %63 = arith.mulf %61, %62 : vector<1x1x8x1xf32>
    %cst_30 = arith.constant 9.99999974E-6 : f32
    %64 = vector.broadcast %cst_30 : f32 to vector<1x1x8x1xf32>
    %65 = arith.addf %63, %64 : vector<1x1x8x1xf32>
    %66 = math.rsqrt %65 : vector<1x1x8x1xf32>
    %67 = vector.shape_cast %50 : vector<8x1xf32> to vector<1x1x8x1xf32>
    %68 = arith.mulf %67, %66 : vector<1x1x8x1xf32>
    %69 = vector.broadcast %68 : vector<1x1x8x1xf32> to vector<1x4x8x32xf32>
    %70 = arith.mulf %58, %69 : vector<1x4x8x32xf32>
    %71 = vector.shape_cast %52 : vector<8x1xf32> to vector<1x1x8x1xf32>
    %72 = vector.broadcast %71 : vector<1x1x8x1xf32> to vector<1x4x8x32xf32>
    %73 = arith.addf %70, %72 : vector<1x4x8x32xf32>
    %cst_31 = arith.constant 0.000000e+00 : f32
    %74 = vector.broadcast %cst_31 : f32 to vector<1x4x8x32xf32>
    %75 = arith.cmpf oge, %73, %74 : vector<1x4x8x32xf32>
    %cst_32 = arith.constant 0.00999999977 : f32
    %76 = vector.broadcast %cst_32 : f32 to vector<1x4x8x32xf32>
    %77 = arith.mulf %76, %73 : vector<1x4x8x32xf32>
    %78 = arith.select %75, %73, %77 : vector<1x4x8x32xi1>, vector<1x4x8x32xf32>
    %c2_33 = arith.constant 2 : index
    %c0_34 = arith.constant 0 : index
    %79 = vector.load %arg3[%c2_33, %c0_34] : memref<3x32xf32, #tpu.memory_space<vmem>>, vector<1x32xf32>
    %80 = vector.shape_cast %79 : vector<1x32xf32> to vector<32xf32>
    %81 = vector.shape_cast %80 : vector<32xf32> to vector<1x1x1x32xf32>
    %82 = vector.broadcast %81 : vector<1x1x1x32xf32> to vector<1x4x8x32xf32>
    %83 = arith.mulf %78, %82 : vector<1x4x8x32xf32>
    %cst_35 = arith.constant dense<0.000000e+00> : vector<1x4x8xf32>
    %84 = vector.multi_reduction <add>, %83, %cst_35 [3] : vector<1x4x8x32xf32> to vector<1x4x8xf32>
    %85 = vector.shape_cast %84 : vector<1x4x8xf32> to vector<1x4x8x1xf32>
    %c4 = arith.constant 4 : index
    %c0_36 = arith.constant 0 : index
    %c0_37 = arith.constant 0 : index
    %86 = vector.load %arg4[%c4, %c0_36, %c0_37] : memref<6x8x1xf32, #tpu.memory_space<vmem>>, vector<1x8x1xf32>
    %87 = vector.shape_cast %86 : vector<1x8x1xf32> to vector<8x1xf32>
    %c5 = arith.constant 5 : index
    %c0_38 = arith.constant 0 : index
    %c0_39 = arith.constant 0 : index
    %88 = vector.load %arg4[%c5, %c0_38, %c0_39] : memref<6x8x1xf32, #tpu.memory_space<vmem>>, vector<1x8x1xf32>
    %89 = vector.shape_cast %88 : vector<1x8x1xf32> to vector<8x1xf32>
    %cst_40 = arith.constant dense<0.000000e+00> : vector<1x8xf32>
    %90 = vector.multi_reduction <add>, %85, %cst_40 [1, 3] : vector<1x4x8x1xf32> to vector<1x8xf32>
    %91 = vector.shape_cast %90 : vector<1x8xf32> to vector<1x1x8x1xf32>
    %cst_41 = arith.constant 2.500000e-01 : f32
    %92 = vector.broadcast %cst_41 : f32 to vector<1x1x8x1xf32>
    %93 = arith.mulf %91, %92 : vector<1x1x8x1xf32>
    %94 = vector.broadcast %93 : vector<1x1x8x1xf32> to vector<1x4x8x1xf32>
    %95 = arith.subf %85, %94 : vector<1x4x8x1xf32>
    %96 = arith.mulf %95, %95 : vector<1x4x8x1xf32>
    %cst_42 = arith.constant dense<0.000000e+00> : vector<1x8xf32>
    %97 = vector.multi_reduction <add>, %96, %cst_42 [1, 3] : vector<1x4x8x1xf32> to vector<1x8xf32>
    %98 = vector.shape_cast %97 : vector<1x8xf32> to vector<1x1x8x1xf32>
    %cst_43 = arith.constant 2.500000e-01 : f32
    %99 = vector.broadcast %cst_43 : f32 to vector<1x1x8x1xf32>
    %100 = arith.mulf %98, %99 : vector<1x1x8x1xf32>
    %cst_44 = arith.constant 9.99999974E-6 : f32
    %101 = vector.broadcast %cst_44 : f32 to vector<1x1x8x1xf32>
    %102 = arith.addf %100, %101 : vector<1x1x8x1xf32>
    %103 = math.rsqrt %102 : vector<1x1x8x1xf32>
    %104 = vector.shape_cast %87 : vector<8x1xf32> to vector<1x1x8x1xf32>
    %105 = arith.mulf %104, %103 : vector<1x1x8x1xf32>
    %106 = vector.broadcast %105 : vector<1x1x8x1xf32> to vector<1x4x8x1xf32>
    %107 = arith.mulf %95, %106 : vector<1x4x8x1xf32>
    %108 = vector.shape_cast %89 : vector<8x1xf32> to vector<1x1x8x1xf32>
    %109 = vector.broadcast %108 : vector<1x1x8x1xf32> to vector<1x4x8x1xf32>
    %110 = arith.addf %107, %109 : vector<1x4x8x1xf32>
    %111 = vector.shape_cast %110 : vector<1x4x8x1xf32> to vector<1x4x8xf32>
    %cst_45 = arith.constant dense<0.000000e+00> : vector<1x4xf32>
    %112 = vector.multi_reduction <add>, %111, %cst_45 [2] : vector<1x4x8xf32> to vector<1x4xf32>
    %cst_46 = arith.constant 8.000000e+00 : f32
    %113 = vector.broadcast %cst_46 : f32 to vector<1x4xf32>
    %114 = arith.divf %112, %113 : vector<1x4xf32>
    %115 = tpu.transpose %114, [1, 0] : vector<1x4xf32> -> vector<4x1xf32>
    %c0_47 = arith.constant 0 : index
    %c0_48 = arith.constant 0 : index
    %116 = vector.load %arg5[%c0_47, %c0_48] : memref<4x1xf32, #tpu.memory_space<vmem>>, vector<4x1xf32>
    tpu.vector_store %arg5[%c0_47, %c0_48], %115 {strides = array<i32>} : memref<4x1xf32, #tpu.memory_space<vmem>>, vector<4x1xf32>,
    return
  }
  func.func @transform_0(%arg0: i32) -> (i32, i32, i32) {
    %c0_i32 = arith.constant 0 : i32
    %c0_i32_0 = arith.constant 0 : i32
    %c0_i32_1 = arith.constant 0 : i32
    return %arg0, %c0_i32, %c0_i32_0 : i32, i32, i32
  }
  func.func @transform_1(%arg0: i32) -> (i32, i32) {
    %c0_i32 = arith.constant 0 : i32
    %c0_i32_0 = arith.constant 0 : i32
    %c0_i32_1 = arith.constant 0 : i32
    return %c0_i32, %c0_i32_0 : i32, i32
  }
  func.func @transform_2(%arg0: i32) -> (i32, i32) {
    %c0_i32 = arith.constant 0 : i32
    %c0_i32_0 = arith.constant 0 : i32
    %c0_i32_1 = arith.constant 0 : i32
    return %c0_i32, %c0_i32_0 : i32, i32
  }
  func.func @transform_3(%arg0: i32) -> (i32, i32, i32) {
    %c0_i32 = arith.constant 0 : i32
    %c0_i32_0 = arith.constant 0 : i32
    %c0_i32_1 = arith.constant 0 : i32
    %c0_i32_2 = arith.constant 0 : i32
    return %c0_i32, %c0_i32_0, %c0_i32_1 : i32, i32, i32
  }
  func.func @transform_4(%arg0: i32) -> (i32, i32) {
    %c0_i32 = arith.constant 0 : i32
    %c0_i32_0 = arith.constant 0 : i32
    return %c0_i32, %arg0 : i32, i32
  }
}

</mosaic_0001>

<llo_original>
// kernel: tpu_custom_call.1
$region0: #{tpu_custom_call.1}
  #allocation0 [shape = 'u32[]', space=smem, size = 0x4, offset = 0x4, fixed_abs, tag = 'smem constant byte address 0x4 - core index']
  #allocation1 [shape = 'u32[144,128]{1,0:T(1,128)}', space=vmem, size = 0x12000, scoped, tag = 'internal scratch']
  %s0 = inlined_call_operand.vmem [shape: f32[1,32,64], index: 0, kind: input, shape index: {}]
  %s1 = inlined_call_operand.vmem [shape: f32[96,32], index: 1, kind: input, shape index: {}]
  %s2 = inlined_call_operand.vmem [shape: f32[3,32], index: 2, kind: input, shape index: {}]
  %s3 = inlined_call_operand.vmem [shape: f32[6,8,1], index: 3, kind: input, shape index: {}]
  %s4 = inlined_call_operand.vmem [shape: f32[4,1], index: 4, kind: output, shape index: {}]
  %s5 = sld [smem:[#allocation0]]
  $region26: #{tpu_custom_call.1} parent=0
    _
  %s7 = ssub.s32 1, %s5
  %s8 = scalar_select 0, %s7, %s5
  // Predicated region
  $region2: #{tpu_custom_call.1} parent=0 // pred_check
    _
  $region3: #{tpu_custom_call.1} parent=0 // pred_check_branch
    %10 = sbr.rel (0) target = $region5
  $region4: #{tpu_custom_call.1} parent=0 // pred_region
    _
  $region5: #{tpu_custom_call.1} parent=0 // pred_fallthru
    _
  // Predicated region
  $region6: #{tpu_custom_call.1} parent=0 // pred_check
    _
  $region7: #{tpu_custom_call.1} parent=0 // pred_check_branch
    %12 = sbr.rel (0) target = $region9
  $region8: #{tpu_custom_call.1} parent=0 // pred_region
    _
  $region9: #{tpu_custom_call.1} parent=0 // pred_fallthru
    _
  // Predicated region
  $region10: #{tpu_custom_call.1} parent=0 // pred_check
    _
  $region11: #{tpu_custom_call.1} parent=0 // pred_check_branch
    %14 = sbr.rel (0) target = $region13
  $region12: #{tpu_custom_call.1} parent=0 // pred_region
    _
  $region13: #{tpu_custom_call.1} parent=0 // pred_fallthru
    _
  // Predicated region
  $region14: #{tpu_custom_call.1} parent=0 // pred_check
    _
  $region15: #{tpu_custom_call.1} parent=0 // pred_check_branch
    %16 = sbr.rel (0) target = $region17
  $region16: #{tpu_custom_call.1} parent=0 // pred_region
    _
  $region17: #{tpu_custom_call.1} parent=0 // pred_fallthru
    _
  %v17 = vld [vmem:[%s0] sm:$0xff]
  %v18 = vld [vmem:[%s0 + $0x8] sm:$0xff]
  %v19 = vld [vmem:[%s0 + $0x10] sm:$0xff]
  %v20 = vld [vmem:[%s0 + $0x18] sm:$0xff]
  %v21 = vld [vmem:[%s1] sm:$0xff]
  %v22 = vld [vmem:[%s1 + $0x8] sm:$0xff]
  %v23 = vld [vmem:[%s1 + $0x10] sm:$0xff]
  %v24 = vld [vmem:[%s1 + $0x18] sm:$0xff]
  %v25 = vld [vmem:[%s1 + $0x20] sm:$0xff]
  %v26 = vld [vmem:[%s1 + $0x28] sm:$0xff]
  %v27 = vld [vmem:[%s1 + $0x30] sm:$0xff]
  %v28 = vld [vmem:[%s1 + $0x38] sm:$0xff]
  %v29 = vld [vmem:[%s1 + $0x40] sm:$0xff]
  %v30 = vld [vmem:[%s1 + $0x48] sm:$0xff]
  %v31 = vld [vmem:[%s1 + $0x50] sm:$0xff]
  %v32 = vld [vmem:[%s1 + $0x58] sm:$0xff]
  %v33 = vld [vmem:[%s2] sm:$0x1]
  %v34 = vlaneseq
  %v35 = vshrl.u32 %v34, 7
  %v36 = vsub.s32 0, %v35
  %v37 = vrot.slane %v33, %v36
  %vm38 = vcmask 523264
  %v40 = vsel %vm38, %v17, 0
  %v43 = vsel %vm38, %v18, 0
  %v46 = vsel %vm38, %v19, 0
  %v49 = vsel %vm38, %v20, 0
  %51 = vmatprep.subr.mxu0 0.0
  %52 = vmatpush1.msra.mxu0 %v21
  %53 = vmatprep.subr.mxu0 0.0
  %54 = vmatpush1.msra.mxu0 %v22
  %55 = vmatprep.subr.mxu0 0.0
  %56 = vmatpush1.msra.mxu0 %v23
  %57 = vmatprep.subr.mxu0 0.0
  %58 = vmatpush1.msra.mxu0 %v24
  %59 = vmatprep.subr.mxu0 0.0
  %60 = vmatpush1.msra.mxu0 %v25
  %61 = vmatprep.subr.mxu0 0.0
  %62 = vmatpush1.msra.mxu0 %v26
  %63 = vmatprep.subr.mxu0 0.0
  %64 = vmatpush1.msra.mxu0 %v27
  %65 = vmatprep.subr.mxu0 0.0
  %66 = vmatpush1.msra.mxu0 %v28
  %67 = vmatprep.subr.mxu0 0.0
  %68 = vmatpush1.msra.mxu0 0.0
  %69 = vmatprep.subr.mxu0 0.0
  %70 = vmatpush1.msra.mxu0 0.0
  %71 = vmatprep.subr.mxu0 0.0
  %72 = vmatpush1.msra.mxu0 0.0
  %73 = vmatprep.subr.mxu0 0.0
  %74 = vmatpush1.msra.mxu0 0.0
  %75 = vmatprep.subr.mxu0 0.0
  %76 = vmatpush1.msra.mxu0 0.0
  %77 = vmatprep.subr.mxu0 0.0
  %78 = vmatpush1.msra.mxu0 0.0
  %79 = vmatprep.subr.mxu0 0.0
  %80 = vmatpush1.msra.mxu0 0.0
  %81 = vmatprep.subr.mxu0 0.0
  %82 = vmatpush1.msra.mxu0 0.0
  %83 = vmatprep.subr.mxu0 0.0
  %84 = vmatpush1.msra.mxu0 0.0
  %85 = vmatprep.subr.mxu0 0.0
  %86 = vmatpush1.msra.mxu0 0.0
  %87 = vmatprep.subr.mxu0 0.0
  %88 = vmatpush1.msra.mxu0 0.0
  %89 = vmatprep.subr.mxu0 0.0
  %90 = vmatpush1.msra.mxu0 0.0
  %91 = vmatprep.subr.mxu0 0.0
  %92 = vmatpush1.msra.mxu0 0.0
  %93 = vmatprep.subr.mxu0 0.0
  %94 = vmatpush1.msra.mxu0 0.0
  %95 = vmatprep.subr.mxu0 0.0
  %96 = vmatpush1.msra.mxu0 0.0
  %97 = vmatprep.subr.mxu0 0.0
  %98 = vmatpush1.msra.mxu0 0.0
  %99 = vmatprep.subr.mxu0 0.0
  %100 = vmatpush1.msra.mxu0 0.0
  %101 = vmatprep.subr.mxu0 0.0
  %102 = vmatpush1.msra.mxu0 0.0
  %103 = vmatprep.subr.mxu0 0.0
  %104 = vmatpush1.msra.mxu0 0.0
  %105 = vmatprep.subr.mxu0 0.0
  %106 = vmatpush1.msra.mxu0 0.0
  %107 = vmatprep.subr.mxu0 0.0
  %108 = vmatpush1.msra.mxu0 0.0
  %109 = vmatprep.subr.mxu0 0.0
  %110 = vmatpush1.msra.mxu0 0.0
  %111 = vmatprep.subr.mxu0 0.0
  %112 = vmatpush1.msra.mxu0 0.0
  %113 = vmatprep.subr.mxu0 0.0
  %114 = vmatpush1.msra.mxu0 0.0
  %115 = vmatprep.mubr.f32.mxu0 0.0
  %116 = vmatmul.mubr.f32.gmra.mrb[0].mxu0 %v40
  %v117 = vpop.f32.mrb[0].mxu0
  %v118 = vadd.f32 %v37, %v117
  %v119 = vpop.f32.mrb[0].mxu0
  %120 = vmatprep.mubr.f32.mxu0 0.0
  %121 = vmatmul.mubr.f32.gmra.mrb[0].mxu0 %v43
  %v122 = vpop.f32.mrb[0].mxu0
  %v123 = vadd.f32 %v37, %v122
  %v124 = vpop.f32.mrb[0].mxu0
  %125 = vmatprep.mubr.f32.mxu0 0.0
  %126 = vmatmul.mubr.f32.gmra.mrb[0].mxu0 %v46
  %v127 = vpop.f32.mrb[0].mxu0
  %v128 = vadd.f32 %v37, %v127
  %v129 = vpop.f32.mrb[0].mxu0
  %130 = vmatprep.mubr.f32.mxu0 0.0
  %131 = vmatmul.mubr.f32.gmra.mrb[0].mxu0 %v49
  %v132 = vpop.f32.mrb[0].mxu0
  %v133 = vadd.f32 %v37, %v132
  %v134 = vpop.f32.mrb[0].mxu0
  %135 = vdwg.mxu0
  %v136 = vld [vmem:[%s3] sm:$0xff]
  %s137 = scalar_lea.vmem %s3, 8
  %v138 = vld [vmem:[%s137] sm:$0xff]
  %vm139 = vcmask 261120
  %v140 = vsel %vm139, %v118, 0.0
  %v141 = vsel %vm139, %v123, 0.0
  %v142 = vadd.f32 %v140, %v141
  %v143 = vsel %vm139, %v128, 0.0
  %v144 = vadd.f32 %v142, %v143
  %v145 = vsel %vm139, %v133, 0.0
  %v146 = vadd.f32 %v144, %v145
  %147 = vadd.xlane.f32.xlu0 %v146
  %v148 = vpop.xlane.xlu0 %147
  %v149 = vmul.f32 %v148, 0.0078125
  %v150 = vsub.f32 %v118, %v149
  %v151 = vsub.f32 %v123, %v149
  %v152 = vsub.f32 %v128, %v149
  %v153 = vsub.f32 %v133, %v149
  %v154 = vmul.f32 %v150, %v150
  %v155 = vmul.f32 %v151, %v151
  %v156 = vmul.f32 %v152, %v152
  %v157 = vmul.f32 %v153, %v153
  %v158 = vsel %vm139, %v154, 0.0
  %v159 = vsel %vm139, %v155, 0.0
  %v160 = vadd.f32 %v158, %v159
  %v161 = vsel %vm139, %v156, 0.0
  %v162 = vadd.f32 %v160, %v161
  %v163 = vsel %vm139, %v157, 0.0
  %v164 = vadd.f32 %v162, %v163
  %165 = vadd.xlane.f32.xlu0 %v164
  %v166 = vpop.xlane.xlu0 %165
  %v167 = vmul.f32 %v166, 0.0078125
  %v168 = vadd.f32 %v167, 1e-05
  %v169 = vrsqrt.pop %v168
  %v170 = vmul.f32 %v136, %v169
  %172 = vset.pattern.permute.xlu0 0
  %173 = vperm.xlu0 %172, %v170
  %v174 = vpop.permute.xlu0 %173
  %v176 = vmul.f32 %v150, %v174
  %v177 = vmul.f32 %v151, %v174
  %v178 = vmul.f32 %v152, %v174
  %v179 = vmul.f32 %v153, %v174
  %181 = vset.pattern.permute.xlu0 0
  %182 = vperm.xlu0 %181, %v138
  %v183 = vpop.permute.xlu0 %182
  %v185 = vadd.f32 %v176, %v183
  %v186 = vadd.f32 %v177, %v183
  %v187 = vadd.f32 %v178, %v183
  %v188 = vadd.f32 %v179, %v183
  %vm189 = vcmp.ge.f32.partialorder %v185, 0.0
  %vm190 = vcmp.ge.f32.partialorder %v186, 0.0
  %vm191 = vcmp.ge.f32.partialorder %v187, 0.0
  %vm192 = vcmp.ge.f32.partialorder %v188, 0.0
  %v193 = vmul.f32 %v185, 0.01
  %v194 = vmul.f32 %v186, 0.01
  %v195 = vmul.f32 %v187, 0.01
  %v196 = vmul.f32 %v188, 0.01
  %v197 = vsel %vm189, %v185, %v193
  %v198 = vsel %vm190, %v186, %v194
  %v199 = vsel %vm191, %v187, %v195
  %v200 = vsel %vm192, %v188, %v196
  %v201 = vld [vmem:[%s2 + $0x1] sm:$0x1]
  %v202 = vlaneseq
  %v203 = vshrl.u32 %v202, 7
  %v204 = vsub.s32 0, %v203
  %v205 = vrot.slane %v201, %v204
  %v207 = vsel %vm139, %v197, 0
  %v210 = vsel %vm139, %v198, 0
  %v213 = vsel %vm139, %v199, 0
  %v216 = vsel %vm139, %v200, 0
  %218 = vmatprep.subr.mxu0 0.0
  %219 = vmatpush1.msra.mxu0 %v29
  %220 = vmatprep.subr.mxu0 0.0
  %221 = vmatpush1.msra.mxu0 %v30
  %222 = vmatprep.subr.mxu0 0.0
  %223 = vmatpush1.msra.mxu0 %v31
  %224 = vmatprep.subr.mxu0 0.0
  %225 = vmatpush1.msra.mxu0 %v32
  %226 = vmatprep.subr.mxu0 0.0
  %227 = vmatpush1.msra.mxu0 0.0
  %228 = vmatprep.subr.mxu0 0.0
  %229 = vmatpush1.msra.mxu0 0.0
  %230 = vmatprep.subr.mxu0 0.0
  %231 = vmatpush1.msra.mxu0 0.0
  %232 = vmatprep.subr.mxu0 0.0
  %233 = vmatpush1.msra.mxu0 0.0
  %234 = vmatprep.subr.mxu0 0.0
  %235 = vmatpush1.msra.mxu0 0.0
  %236 = vmatprep.subr.mxu0 0.0
  %237 = vmatpush1.msra.mxu0 0.0
  %238 = vmatprep.subr.mxu0 0.0
  %239 = vmatpush1.msra.mxu0 0.0
  %240 = vmatprep.subr.mxu0 0.0
  %241 = vmatpush1.msra.mxu0 0.0
  %242 = vmatprep.subr.mxu0 0.0
  %243 = vmatpush1.msra.mxu0 0.0
  %244 = vmatprep.subr.mxu0 0.0
  %245 = vmatpush1.msra.mxu0 0.0
  %246 = vmatprep.subr.mxu0 0.0
  %247 = vmatpush1.msra.mxu0 0.0
  %248 = vmatprep.subr.mxu0 0.0
  %249 = vmatpush1.msra.mxu0 0.0
  %250 = vmatprep.subr.mxu0 0.0
  %251 = vmatpush1.msra.mxu0 0.0
  %252 = vmatprep.subr.mxu0 0.0
  %253 = vmatpush1.msra.mxu0 0.0
  %254 = vmatprep.subr.mxu0 0.0
  %255 = vmatpush1.msra.mxu0 0.0
  %256 = vmatprep.subr.mxu0 0.0
  %257 = vmatpush1.msra.mxu0 0.0
  %258 = vmatprep.subr.mxu0 0.0
  %259 = vmatpush1.msra.mxu0 0.0
  %260 = vmatprep.subr.mxu0 0.0
  %261 = vmatpush1.msra.mxu0 0.0
  %262 = vmatprep.subr.mxu0 0.0
  %263 = vmatpush1.msra.mxu0 0.0
  %264 = vmatprep.subr.mxu0 0.0
  %265 = vmatpush1.msra.mxu0 0.0
  %266 = vmatprep.subr.mxu0 0.0
  %267 = vmatpush1.msra.mxu0 0.0
  %268 = vmatprep.subr.mxu0 0.0
  %269 = vmatpush1.msra.mxu0 0.0
  %270 = vmatprep.subr.mxu0 0.0
  %271 = vmatpush1.msra.mxu0 0.0
  %272 = vmatprep.subr.mxu0 0.0
  %273 = vmatpush1.msra.mxu0 0.0
  %274 = vmatprep.subr.mxu0 0.0
  %275 = vmatpush1.msra.mxu0 0.0
  %276 = vmatprep.subr.mxu0 0.0
  %277 = vmatpush1.msra.mxu0 0.0
  %278 = vmatprep.subr.mxu0 0.0
  %279 = vmatpush1.msra.mxu0 0.0
  %280 = vmatprep.subr.mxu0 0.0
  %281 = vmatpush1.msra.mxu0 0.0
  %282 = vmatprep.mubr.f32.mxu0 0.0
  %283 = vmatmul.mubr.f32.gmra.mrb[0].mxu0 %v207
  %v284 = vpop.f32.mrb[0].mxu0
  %v285 = vadd.f32 %v205, %v284
  %v286 = vpop.f32.mrb[0].mxu0
  %287 = vmatprep.mubr.f32.mxu0 0.0
  %288 = vmatmul.mubr.f32.gmra.mrb[0].mxu0 %v210
  %v289 = vpop.f32.mrb[0].mxu0
  %v290 = vadd.f32 %v205, %v289
  %v291 = vpop.f32.mrb[0].mxu0
  %292 = vmatprep.mubr.f32.mxu0 0.0
  %293 = vmatmul.mubr.f32.gmra.mrb[0].mxu0 %v213
  %v294 = vpop.f32.mrb[0].mxu0
  %v295 = vadd.f32 %v205, %v294
  %v296 = vpop.f32.mrb[0].mxu0
  %297 = vmatprep.mubr.f32.mxu0 0.0
  %298 = vmatmul.mubr.f32.gmra.mrb[0].mxu0 %v216
  %v299 = vpop.f32.mrb[0].mxu0
  %v300 = vadd.f32 %v205, %v299
  %v301 = vpop.f32.mrb[0].mxu0
  %302 = vdwg.mxu0
  %s303 = scalar_lea.vmem %s3, 16
  %v304 = vld [vmem:[%s303] sm:$0xff]
  %s305 = scalar_lea.vmem %s3, 24
  %v306 = vld [vmem:[%s305] sm:$0xff]
  %v307 = vsel %vm139, %v285, 0.0
  %v308 = vsel %vm139, %v290, 0.0
  %v309 = vadd.f32 %v307, %v308
  %v310 = vsel %vm139, %v295, 0.0
  %v311 = vadd.f32 %v309, %v310
  %v312 = vsel %vm139, %v300, 0.0
  %v313 = vadd.f32 %v311, %v312
  %314 = vadd.xlane.f32.xlu0 %v313
  %v315 = vpop.xlane.xlu0 %314
  %v316 = vmul.f32 %v315, 0.0078125
  %v317 = vsub.f32 %v285, %v316
  %v318 = vsub.f32 %v290, %v316
  %v319 = vsub.f32 %v295, %v316
  %v320 = vsub.f32 %v300, %v316
  %v321 = vmul.f32 %v317, %v317
  %v322 = vmul.f32 %v318, %v318
  %v323 = vmul.f32 %v319, %v319
  %v324 = vmul.f32 %v320, %v320
  %v325 = vsel %vm139, %v321, 0.0
  %v326 = vsel %vm139, %v322, 0.0
  %v327 = vadd.f32 %v325, %v326
  %v328 = vsel %vm139, %v323, 0.0
  %v329 = vadd.f32 %v327, %v328
  %v330 = vsel %vm139, %v324, 0.0
  %v331 = vadd.f32 %v329, %v330
  %332 = vadd.xlane.f32.xlu0 %v331
  %v333 = vpop.xlane.xlu0 %332
  %v334 = vmul.f32 %v333, 0.0078125
  %v335 = vadd.f32 %v334, 1e-05
  %v336 = vrsqrt.pop %v335
  %v337 = vmul.f32 %v304, %v336
  %339 = vset.pattern.permute.xlu0 0
  %340 = vperm.xlu0 %339, %v337
  %v341 = vpop.permute.xlu0 %340
  %v343 = vmul.f32 %v317, %v341
  %v344 = vmul.f32 %v318, %v341
  %v345 = vmul.f32 %v319, %v341
  %v346 = vmul.f32 %v320, %v341
  %348 = vset.pattern.permute.xlu0 0
  %349 = vperm.xlu0 %348, %v306
  %v350 = vpop.permute.xlu0 %349
  %v352 = vadd.f32 %v343, %v350
  %v353 = vadd.f32 %v344, %v350
  %v354 = vadd.f32 %v345, %v350
  %v355 = vadd.f32 %v346, %v350
  %vm356 = vcmp.ge.f32.partialorder %v352, 0.0
  %vm357 = vcmp.ge.f32.partialorder %v353, 0.0
  %vm358 = vcmp.ge.f32.partialorder %v354, 0.0
  %vm359 = vcmp.ge.f32.partialorder %v355, 0.0
  %v360 = vmul.f32 %v352, 0.01
  %v361 = vmul.f32 %v353, 0.01
  %v362 = vmul.f32 %v354, 0.01
  %v363 = vmul.f32 %v355, 0.01
  %v364 = vsel %vm356, %v352, %v360
  %v365 = vsel %vm357, %v353, %v361
  %v366 = vsel %vm358, %v354, %v362
  %v367 = vsel %vm359, %v355, %v363
  %v368 = vld [vmem:[%s2 + $0x2] sm:$0x1]
  %v369 = vlaneseq
  %v370 = vshrl.u32 %v369, 7
  %v371 = vsub.s32 0, %v370
  %v372 = vrot.slane %v368, %v371
  %v373 = vmul.f32 %v364, %v372
  %v374 = vmul.f32 %v365, %v372
  %v375 = vmul.f32 %v366, %v372
  %v376 = vmul.f32 %v367, %v372
  %v377 = vsel %vm139, %v373, 0.0
  %378 = vadd.xlane.f32.xlu0 %v377
  %v379 = vpop.xlane.xlu0 %378
  %v380 = vsel %vm139, %v374, 0.0
  %381 = vadd.xlane.f32.xlu0 %v380
  %v382 = vpop.xlane.xlu0 %381
  %v383 = vsel %vm139, %v375, 0.0
  %384 = vadd.xlane.f32.xlu0 %v383
  %v385 = vpop.xlane.xlu0 %384
  %v386 = vsel %vm139, %v376, 0.0
  %387 = vadd.xlane.f32.xlu0 %v386
  %v388 = vpop.xlane.xlu0 %387
  %s389 = scalar_lea.vmem %s3, 32
  %v390 = vld [vmem:[%s389] sm:$0xff]
  %s391 = scalar_lea.vmem %s3, 40
  %v392 = vld [vmem:[%s391] sm:$0xff]
  %vm393 = vcmask 7168
  %v394 = vsel %vm393, %v379, 0.0
  %v395 = vsel %vm393, %v382, 0.0
  %v396 = vadd.f32 %v394, %v395
  %v397 = vsel %vm393, %v385, 0.0
  %v398 = vadd.f32 %v396, %v397
  %v399 = vsel %vm393, %v388, 0.0
  %v400 = vadd.f32 %v398, %v399
  %401 = vadd.xlane.f32.xlu0 %v400
  %v402 = vpop.xlane.xlu0 %401
  %v403 = vmul.f32 %v402, 0.25
  %v404 = vsub.f32 %v379, %v403
  %v405 = vsub.f32 %v382, %v403
  %v406 = vsub.f32 %v385, %v403
  %v407 = vsub.f32 %v388, %v403
  %v408 = vmul.f32 %v404, %v404
  %v409 = vmul.f32 %v405, %v405
  %v410 = vmul.f32 %v406, %v406
  %v411 = vmul.f32 %v407, %v407
  %v412 = vsel %vm393, %v408, 0.0
  %v413 = vsel %vm393, %v409, 0.0
  %v414 = vadd.f32 %v412, %v413
  %v415 = vsel %vm393, %v410, 0.0
  %v416 = vadd.f32 %v414, %v415
  %v417 = vsel %vm393, %v411, 0.0
  %v418 = vadd.f32 %v416, %v417
  %419 = vadd.xlane.f32.xlu0 %v418
  %v420 = vpop.xlane.xlu0 %419
  %v421 = vmul.f32 %v420, 0.25
  %v422 = vadd.f32 %v421, 1e-05
  %v423 = vrsqrt.pop %v422
  %v424 = vmul.f32 %v390, %v423
  %v425 = vmul.f32 %v404, %v424
  %v426 = vmul.f32 %v405, %v424
  %v427 = vmul.f32 %v406, %v424
  %v428 = vmul.f32 %v407, %v424
  %v429 = vadd.f32 %v425, %v392
  %v430 = vadd.f32 %v426, %v392
  %v431 = vadd.f32 %v427, %v392
  %v432 = vadd.f32 %v428, %v392
  %437 = vset.pattern.permute.xlu0 0
  %438 = vperm.xlu0 %437, %v429
  %v439 = vpop.permute.xlu0 %438
  %440 = vset.pattern.permute.xlu0 0
  %441 = vperm.xlu0 %440, %v430
  %v442 = vpop.permute.xlu0 %441
  %443 = vset.pattern.permute.xlu0 0
  %444 = vperm.xlu0 %443, %v431
  %v445 = vpop.permute.xlu0 %444
  %446 = vset.pattern.permute.xlu0 0
  %447 = vperm.xlu0 %446, %v432
  %v448 = vpop.permute.xlu0 %447
  %v449 = vlaneseq
  %v450 = vand.u32 %v449, 127
  %v451 = vlaneseq
  %v452 = vshrl.u32 %v451, 7
  %v453 = vsub.s32 %v450, %v452
  %v454 = vrot.slane %v439, %v453
  %v455 = vlaneseq
  %v456 = vshrl.u32 %v455, 7
  %v457 = vsub.s32 %v450, %v456
  %v458 = vrot.slane %v442, %v457
  %v459 = vlaneseq
  %v460 = vshrl.u32 %v459, 7
  %v461 = vsub.s32 %v450, %v460
  %v462 = vrot.slane %v445, %v461
  %v463 = vlaneseq
  %v464 = vshrl.u32 %v463, 7
  %v465 = vsub.s32 %v450, %v464
  %v466 = vrot.slane %v448, %v465
  %vm467 = vcmask 1041409
  %v468 = vsel %vm467, %v458, %v454
  %vm469 = vcmask 1042434
  %v470 = vsel %vm469, %v462, %v468
  %vm471 = vcmask 1043459
  %v472 = vsel %vm471, %v466, %v470
  %vm474 = vcmask 60416
  %v475 = vsel %vm474, %v472, 0.0
  %476 = vadd.xlane.f32.xlu0 %v475
  %v477 = vpop.xlane.xlu0 %476
  %v478 = vrcp.pop 8.0
  %v479 = vmul.f32 %v477, %v478
  %v481 = vlaneseq
  %v482 = vshrl.u32 %v481, 7
  %v483 = vsub.s32 %v450, %v482
  %v484 = vrot.slane %v479, %v483
  %486 = vxpose.xlu0.b32.start [1/16] %v484, 128
  %487 = vxpose.xlu0.b32.cont [2/16] 0.0, 128
  %488 = vxpose.xlu0.b32.cont [3/16] 0.0, 128
  %489 = vxpose.xlu0.b32.cont [4/16] 0.0, 128
  %490 = vxpose.xlu0.b32.cont [5/16] 0.0, 128
  %491 = vxpose.xlu0.b32.cont [6/16] 0.0, 128
  %492 = vxpose.xlu0.b32.cont [7/16] 0.0, 128
  %493 = vxpose.xlu0.b32.cont [8/16] 0.0, 128
  %494 = vxpose.xlu0.b32.cont [9/16] 0.0, 128
  %495 = vxpose.xlu0.b32.cont [10/16] 0.0, 128
  %496 = vxpose.xlu0.b32.cont [11/16] 0.0, 128
  %497 = vxpose.xlu0.b32.cont [12/16] 0.0, 128
  %498 = vxpose.xlu0.b32.cont [13/16] 0.0, 128
  %499 = vxpose.xlu0.b32.cont [14/16] 0.0, 128
  %500 = vxpose.xlu0.b32.cont [15/16] 0.0, 128
  %501 = vxpose.xlu0.b32.end [16/16] 0.0, 128
  %v502 = vpop.trf.xlu0
  %v503 = vpop.trf.xlu0
  %v504 = vpop.trf.xlu0
  %v505 = vpop.trf.xlu0
  %v506 = vpop.trf.xlu0
  %v507 = vpop.trf.xlu0
  %v508 = vpop.trf.xlu0
  %v509 = vpop.trf.xlu0
  %v510 = vpop.trf.xlu0
  %v511 = vpop.trf.xlu0
  %v512 = vpop.trf.xlu0
  %v513 = vpop.trf.xlu0
  %v514 = vpop.trf.xlu0
  %v515 = vpop.trf.xlu0
  %v516 = vpop.trf.xlu0
  %v517 = vpop.trf.xlu0
  %vm518 = vcmask 3072
  %519 = vst.msk [vmem:[%s4] sm:$0xf] %vm518, %v502
  // Predicated region
  $region18: #{tpu_custom_call.1} parent=0 // pred_check
    _
  $region19: #{tpu_custom_call.1} parent=0 // pred_check_branch
    %521 = sbr.rel (0) target = $region21
  $region20: #{tpu_custom_call.1} parent=0 // pred_region
    _
  $region21: #{tpu_custom_call.1} parent=0 // pred_fallthru
    _
  // Predicated region
  $region22: #{tpu_custom_call.1} parent=0 // pred_check
    _
  $region23: #{tpu_custom_call.1} parent=0 // pred_check_branch
    %523 = sbr.rel (0) target = $region25
  $region24: #{tpu_custom_call.1} parent=0 // pred_region
    _
  $region25: #{tpu_custom_call.1} parent=0 // pred_fallthru
    _

</llo_original>
